<compile_context>
chip_gen: v6e
topology: v6e:2x2x1
jax: 0.10.0
libtpu: 0.0.40
codegen_flags: <defaults>
</compile_context>

<pallas_src>
import jax
import jax.numpy as jnp
from jax.experimental import pallas as pl
from jax.experimental.pallas import tpu as pltpu

W3_PAD = 128  # fc3 weight padded to 128 lanes for the MXU (compute is free);
              # only the first out_dim columns are stored to HBM.


def _round_up(n, m):
    return ((n + m - 1) // m) * m


def _mlp_kernel(x_ref, w1_ref, b1_ref, w2_ref, b2_ref, w3_ref, b3_ref, o_ref):
    # fc1 -> ReLU : in-kernel bf16 cast (VALU has slack), MXU matmul, f32 acc.
    x = x_ref[...].astype(jnp.bfloat16)
    h1 = jnp.dot(x, w1_ref[...], preferred_element_type=jnp.float32)
    h1 = jnp.maximum(h1 + b1_ref[...], 0.0)
    # dropout(p=0.3): identity in eval/inference mode.
    # TODO(synk): training-mode dropout needs pltpu.prng_seed/prng_random_bits
    #             plus 1/(1-p) scaling.
    # fc2 -> ReLU
    h2 = jnp.dot(h1.astype(jnp.bfloat16), w2_ref[...],
                 preferred_element_type=jnp.float32)
    h2 = jnp.maximum(h2 + b2_ref[...], 0.0)
    # fc3: matmul against the 128-lane padded weight (proven MXU path), then
    # store only the real out_dim columns -> 64x less output DMA than padded.
    logits = jnp.dot(h2.astype(jnp.bfloat16), w3_ref[...],
                     preferred_element_type=jnp.float32)
    out_dim = o_ref.shape[-1]
    o_ref[...] = (logits[:, :out_dim] + b3_ref[...]).astype(o_ref.dtype)


def prepare_params(params):
    """One-time weight prep: bf16 MXU operands, fc3 weight lane-padded to 128.

    Call once after init/load; pass the result to diabetes_classifier_forward.
    """
    w3 = params["w3"]
    out_dim = w3.shape[1]
    w3_p = jnp.zeros((w3.shape[0], W3_PAD), jnp.bfloat16)
    w3_p = w3_p.at[:, :out_dim].set(w3.astype(jnp.bfloat16))
    return {
        "w1": params["w1"].astype(jnp.bfloat16),
        "b1": params["b1"].astype(jnp.float32),
        "w2": params["w2"].astype(jnp.bfloat16),
        "b2": params["b2"].astype(jnp.float32),
        "w3p": w3_p,
        "b3": params["b3"].astype(jnp.float32),
    }


def diabetes_classifier_forward(x, prepped, *, tb=2048):
    """x: (B, input_size) f32.  prepped: output of prepare_params()."""
    w1, b1 = prepped["w1"], prepped["b1"]
    w2, b2 = prepped["w2"], prepped["b2"]
    w3p, b3 = prepped["w3p"], prepped["b3"]
    B, F = x.shape
    h1_dim = w1.shape[1]          # 128
    h2_dim = w2.shape[1]          # 64
    out_dim = b3.shape[1]         # 2
    w3_pad = w3p.shape[1]         # 128

    # ---- row tiling ---------------------------------------------------------
    # Pad rows only up to a multiple of 8 (sublane), then size the tile so the
    # last tile is (nearly) full: pad waste <= ~8 rows per grid step instead of
    # up to a whole tile.
    pb8 = _round_up(max(B, 1), 8)
    tb = min(tb, pb8)
    grid_n = pl.cdiv(pb8, tb)
    # v7x megacore: with only one tile but a non-trivial batch, split in two so
    # both TensorCores get work (harmless on single-TC v5e/v6e).
    if grid_n == 1 and pb8 >= 1024:
        grid_n = 2
    tb = _round_up(pl.cdiv(pb8, grid_n), 8)
    pb = tb * grid_n
    if pb != B:
        x = jnp.pad(x, ((0, pb - B), (0, 0)))

    resident = lambda i: (0, 0)   # weights/biases stay pinned in VMEM
    out = pl.pallas_call(
        _mlp_kernel,
        out_shape=jax.ShapeDtypeStruct((pb, out_dim), jnp.float32),
        grid=(pb // tb,),
        in_specs=[
            pl.BlockSpec((tb, F), lambda i: (i, 0)),       # x tile (f32)
            pl.BlockSpec((F, h1_dim), resident),           # w1 (bf16)
            pl.BlockSpec((1, h1_dim), resident),           # b1 (f32)
            pl.BlockSpec((h1_dim, h2_dim), resident),      # w2 (bf16)
            pl.BlockSpec((1, h2_dim), resident),           # b2 (f32)
            pl.BlockSpec((h2_dim, w3_pad), resident),      # w3 (bf16, padded)
            pl.BlockSpec((1, out_dim), resident),          # b3 (f32, unpadded)
        ],
        out_specs=pl.BlockSpec((tb, out_dim), lambda i: (i, 0)),
        compiler_params=pltpu.CompilerParams(
            dimension_semantics=("parallel",)),
    )(x, w1, b1, w2, b2, w3p, b3)

    return out[:B]


def init_params(key, input_size):
    """Deterministic init mirroring nn.Linear default (uniform +/- 1/sqrt(fan_in))."""
    dims = [(input_size, 128), (128, 64), (64, 2)]
    params = {}
    for i, (fan_in, fan_out) in enumerate(dims, start=1):
        key, kw, kb = jax.random.split(key, 3)
        bound = 1.0 / jnp.sqrt(jnp.float32(fan_in))
        params[f"w{i}"] = jax.random.uniform(
            kw, (fan_in, fan_out), jnp.float32, -bound, bound)
        params[f"b{i}"] = jax.random.uniform(
            kb, (1, fan_out), jnp.float32, -bound, bound)
    return params


def reference_forward_f32(x, params):
    h1 = jnp.maximum(x @ params["w1"] + params["b1"], 0.0)
    h2 = jnp.maximum(h1 @ params["w2"] + params["b2"], 0.0)
    return h2 @ params["w3"] + params["b3"]


def reference_forward_bf16(x, params):
    """Mirror of the kernel's numerics: bf16 MXU operands, f32 accumulation."""
    bf = jnp.bfloat16
    h1 = jnp.dot(x.astype(bf), params["w1"].astype(bf),
                 preferred_element_type=jnp.float32) + params["b1"]
    h1 = jnp.maximum(h1, 0.0)
    h2 = jnp.dot(h1.astype(bf), params["w2"].astype(bf),
                 preferred_element_type=jnp.float32) + params["b2"]
    h2 = jnp.maximum(h2, 0.0)
    return jnp.dot(h2.astype(bf), params["w3"].astype(bf),
                   preferred_element_type=jnp.float32) + params["b3"]


if __name__ == "__main__":
    key = jax.random.PRNGKey(0)
    input_size = 8   # Pima diabetes dataset has 8 features
    batch = 8

    k_params, k_x = jax.random.split(key)
    params = init_params(k_params, input_size)
    prepped = prepare_params(params)     # one-time bf16 / padded weight prep
    x = jax.random.normal(k_x, (batch, input_size), jnp.float32)

    out = diabetes_classifier_forward(x, prepped)
    out = jax.block_until_ready(out)
    assert out.shape == (batch, 2)

    # Tight check against a bf16-operand reference (same numerics as kernel),
    # loose check against the pure-f32 reference (bf16 rounding only).
    ref_bf = reference_forward_bf16(x, params)
    ref_f32 = reference_forward_f32(x, params)
    assert jnp.allclose(out, ref_bf, atol=1e-2, rtol=1e-2)
    assert jnp.allclose(out, ref_f32, atol=5e-2, rtol=5e-2)
    print("KERNEL_OK")
</pallas_src>

<mosaic_0001>
module attributes {stable_mosaic.version = 11 : i64} {
  func.func @_mlp_kernel(%arg0: i32, %arg1: memref<8x8xf32, #tpu.memory_space<vmem>>, %arg2: memref<8x128xbf16, #tpu.memory_space<vmem>>, %arg3: memref<1x128xf32, #tpu.memory_space<vmem>>, %arg4: memref<128x64xbf16, #tpu.memory_space<vmem>>, %arg5: memref<1x64xf32, #tpu.memory_space<vmem>>, %arg6: memref<64x128xbf16, #tpu.memory_space<vmem>>, %arg7: memref<1x2xf32, #tpu.memory_space<vmem>>, %arg8: memref<8x2xf32, #tpu.memory_space<vmem>>) attributes {dimension_semantics = [#tpu.dimension_semantics<parallel>], iteration_bounds = array<i64: 1>, scalar_prefetch = 0 : i64, scratch_operands = 0 : i64, tpu.core_type = #tpu.core_type<tc>, window_params = [{transform_indices = @transform_0, window_bounds = array<i64: 8, 8>}, {pipeline_mode = #tpu.pipeline_mode<synchronous>, transform_indices = @transform_1, window_bounds = array<i64: 8, 128>}, {pipeline_mode = #tpu.pipeline_mode<synchronous>, transform_indices = @transform_2, window_bounds = array<i64: 1, 128>}, {pipeline_mode = #tpu.pipeline_mode<synchronous>, transform_indices = @transform_3, window_bounds = array<i64: 128, 64>}, {pipeline_mode = #tpu.pipeline_mode<synchronous>, transform_indices = @transform_4, window_bounds = array<i64: 1, 64>}, {pipeline_mode = #tpu.pipeline_mode<synchronous>, transform_indices = @transform_5, window_bounds = array<i64: 64, 128>}, {pipeline_mode = #tpu.pipeline_mode<synchronous>, transform_indices = @transform_6, window_bounds = array<i64: 1, 2>}, {transform_indices = @transform_7, window_bounds = array<i64: 8, 2>}]} {
    %c0 = arith.constant 0 : index
    %c0_0 = arith.constant 0 : index
    %0 = vector.load %arg1[%c0, %c0_0] : memref<8x8xf32, #tpu.memory_space<vmem>>, vector<8x8xf32>
    %1 = arith.truncf %0 : vector<8x8xf32> to vector<8x8xbf16>
    %c0_1 = arith.constant 0 : index
    %c0_2 = arith.constant 0 : index
    %2 = vector.load %arg2[%c0_1, %c0_2] : memref<8x128xbf16, #tpu.memory_space<vmem>>, vector<8x128xbf16>
    %cst = arith.constant dense<0.000000e+00> : vector<8x128xf32>
    %3 = tpu.matmul %1, %2, %cst {dimension_numbers = #tpu.dot_dimension_numbers<[1], [0], [0], [1], [0, 0, 1, 1], [], []>} : vector<8x8xbf16>, vector<8x128xbf16>, vector<8x128xf32> -> vector<8x128xf32>
    %c0_3 = arith.constant 0 : index
    %c0_4 = arith.constant 0 : index
    %4 = vector.load %arg3[%c0_3, %c0_4] : memref<1x128xf32, #tpu.memory_space<vmem>>, vector<1x128xf32>
    %5 = vector.broadcast %4 : vector<1x128xf32> to vector<8x128xf32>
    %6 = arith.addf %3, %5 : vector<8x128xf32>
    %cst_5 = arith.constant 0.000000e+00 : f32
    %7 = vector.broadcast %cst_5 : f32 to vector<8x128xf32>
    %8 = arith.maximumf %6, %7 : vector<8x128xf32>
    %9 = arith.truncf %8 : vector<8x128xf32> to vector<8x128xbf16>
    %c0_6 = arith.constant 0 : index
    %c0_7 = arith.constant 0 : index
    %10 = vector.load %arg4[%c0_6, %c0_7] : memref<128x64xbf16, #tpu.memory_space<vmem>>, vector<128x64xbf16>
    %cst_8 = arith.constant dense<0.000000e+00> : vector<8x64xf32>
    %11 = tpu.matmul %9, %10, %cst_8 {dimension_numbers = #tpu.dot_dimension_numbers<[1], [0], [0], [1], [0, 0, 1, 1], [], []>} : vector<8x128xbf16>, vector<128x64xbf16>, vector<8x64xf32> -> vector<8x64xf32>
    %c0_9 = arith.constant 0 : index
    %c0_10 = arith.constant 0 : index
    %12 = vector.load %arg5[%c0_9, %c0_10] : memref<1x64xf32, #tpu.memory_space<vmem>>, vector<1x64xf32>
    %13 = vector.broadcast %12 : vector<1x64xf32> to vector<8x64xf32>
    %14 = arith.addf %11, %13 : vector<8x64xf32>
    %cst_11 = arith.constant 0.000000e+00 : f32
    %15 = vector.broadcast %cst_11 : f32 to vector<8x64xf32>
    %16 = arith.maximumf %14, %15 : vector<8x64xf32>
    %17 = arith.truncf %16 : vector<8x64xf32> to vector<8x64xbf16>
    %c0_12 = arith.constant 0 : index
    %c0_13 = arith.constant 0 : index
    %18 = vector.load %arg6[%c0_12, %c0_13] : memref<64x128xbf16, #tpu.memory_space<vmem>>, vector<64x128xbf16>
    %cst_14 = arith.constant dense<0.000000e+00> : vector<8x128xf32>
    %19 = tpu.matmul %17, %18, %cst_14 {dimension_numbers = #tpu.dot_dimension_numbers<[1], [0], [0], [1], [0, 0, 1, 1], [], []>} : vector<8x64xbf16>, vector<64x128xbf16>, vector<8x128xf32> -> vector<8x128xf32>
    %20 = vector.extract_strided_slice %19 {offsets = [0, 0], sizes = [8, 2], strides = [1, 1]} : vector<8x128xf32> to vector<8x2xf32>
    %c0_15 = arith.constant 0 : index
    %c0_16 = arith.constant 0 : index
    %21 = vector.load %arg7[%c0_15, %c0_16] : memref<1x2xf32, #tpu.memory_space<vmem>>, vector<1x2xf32>
    %22 = vector.broadcast %21 : vector<1x2xf32> to vector<8x2xf32>
    %23 = arith.addf %20, %22 : vector<8x2xf32>
    %c0_17 = arith.constant 0 : index
    %c0_18 = arith.constant 0 : index
    %24 = vector.load %arg8[%c0_17, %c0_18] : memref<8x2xf32, #tpu.memory_space<vmem>>, vector<8x2xf32>
    tpu.vector_store %arg8[%c0_17, %c0_18], %23 {strides = array<i32>} : memref<8x2xf32, #tpu.memory_space<vmem>>, vector<8x2xf32>,
    return
  }
  func.func @transform_0(%arg0: i32) -> (i32, i32) {
    %c0_i32 = arith.constant 0 : i32
    %c0_i32_0 = arith.constant 0 : i32
    return %arg0, %c0_i32 : i32, i32
  }
  func.func @transform_1(%arg0: i32) -> (i32, i32) {
    %c0_i32 = arith.constant 0 : i32
    %c0_i32_0 = arith.constant 0 : i32
    %c0_i32_1 = arith.constant 0 : i32
    return %c0_i32, %c0_i32_0 : i32, i32
  }
  func.func @transform_2(%arg0: i32) -> (i32, i32) {
    %c0_i32 = arith.constant 0 : i32
    %c0_i32_0 = arith.constant 0 : i32
    %c0_i32_1 = arith.constant 0 : i32
    return %c0_i32, %c0_i32_0 : i32, i32
  }
  func.func @transform_3(%arg0: i32) -> (i32, i32) {
    %c0_i32 = arith.constant 0 : i32
    %c0_i32_0 = arith.constant 0 : i32
    %c0_i32_1 = arith.constant 0 : i32
    return %c0_i32, %c0_i32_0 : i32, i32
  }
  func.func @transform_4(%arg0: i32) -> (i32, i32) {
    %c0_i32 = arith.constant 0 : i32
    %c0_i32_0 = arith.constant 0 : i32
    %c0_i32_1 = arith.constant 0 : i32
    return %c0_i32, %c0_i32_0 : i32, i32
  }
  func.func @transform_5(%arg0: i32) -> (i32, i32) {
    %c0_i32 = arith.constant 0 : i32
    %c0_i32_0 = arith.constant 0 : i32
    %c0_i32_1 = arith.constant 0 : i32
    return %c0_i32, %c0_i32_0 : i32, i32
  }
  func.func @transform_6(%arg0: i32) -> (i32, i32) {
    %c0_i32 = arith.constant 0 : i32
    %c0_i32_0 = arith.constant 0 : i32
    %c0_i32_1 = arith.constant 0 : i32
    return %c0_i32, %c0_i32_0 : i32, i32
  }
  func.func @transform_7(%arg0: i32) -> (i32, i32) {
    %c0_i32 = arith.constant 0 : i32
    %c0_i32_0 = arith.constant 0 : i32
    return %arg0, %c0_i32 : i32, i32
  }
}

</mosaic_0001>

<llo_original>
// kernel: tpu_custom_call.1
$region0: #{tpu_custom_call.1}
  #allocation0 [shape = 'u32[]', space=smem, size = 0x4, offset = 0x4, fixed_abs, tag = 'smem constant byte address 0x4 - core index']
  #allocation1 [shape = 'u32[144,128]{1,0:T(1,128)}', space=vmem, size = 0x12000, scoped, tag = 'internal scratch']
  %s0 = inlined_call_operand.vmem [shape: f32[8,8], index: 0, kind: input, shape index: {}]
  %s1 = inlined_call_operand.vmem [shape: bf16[8,128], index: 1, kind: input, shape index: {}]
  %s2 = inlined_call_operand.vmem [shape: f32[1,128], index: 2, kind: input, shape index: {}]
  %s3 = inlined_call_operand.vmem [shape: bf16[128,64], index: 3, kind: input, shape index: {}]
  %s4 = inlined_call_operand.vmem [shape: f32[1,64], index: 4, kind: input, shape index: {}]
  %s5 = inlined_call_operand.vmem [shape: bf16[64,128], index: 5, kind: input, shape index: {}]
  %s6 = inlined_call_operand.vmem [shape: f32[1,2], index: 6, kind: input, shape index: {}]
  %s7 = inlined_call_operand.vmem [shape: f32[8,2], index: 7, kind: output, shape index: {}]
  %s8 = sld [smem:[#allocation0]]
  $region38: #{tpu_custom_call.1} parent=0
    _
  %s10 = ssub.s32 1, %s8
  %s11 = scalar_select 0, %s10, %s8
  // Predicated region
  $region2: #{tpu_custom_call.1} parent=0 // pred_check
    _
  $region3: #{tpu_custom_call.1} parent=0 // pred_check_branch
    %13 = sbr.rel (0) target = $region5
  $region4: #{tpu_custom_call.1} parent=0 // pred_region
    _
  $region5: #{tpu_custom_call.1} parent=0 // pred_fallthru
    _
  // Predicated region
  $region6: #{tpu_custom_call.1} parent=0 // pred_check
    _
  $region7: #{tpu_custom_call.1} parent=0 // pred_check_branch
    %15 = sbr.rel (0) target = $region9
  $region8: #{tpu_custom_call.1} parent=0 // pred_region
    _
  $region9: #{tpu_custom_call.1} parent=0 // pred_fallthru
    _
  // Predicated region
  $region10: #{tpu_custom_call.1} parent=0 // pred_check
    _
  $region11: #{tpu_custom_call.1} parent=0 // pred_check_branch
    %17 = sbr.rel (0) target = $region13
  $region12: #{tpu_custom_call.1} parent=0 // pred_region
    _
  $region13: #{tpu_custom_call.1} parent=0 // pred_fallthru
    _
  // Predicated region
  $region14: #{tpu_custom_call.1} parent=0 // pred_check
    _
  $region15: #{tpu_custom_call.1} parent=0 // pred_check_branch
    %19 = sbr.rel (0) target = $region17
  $region16: #{tpu_custom_call.1} parent=0 // pred_region
    _
  $region17: #{tpu_custom_call.1} parent=0 // pred_fallthru
    _
  // Predicated region
  $region18: #{tpu_custom_call.1} parent=0 // pred_check
    _
  $region19: #{tpu_custom_call.1} parent=0 // pred_check_branch
    %21 = sbr.rel (0) target = $region21
  $region20: #{tpu_custom_call.1} parent=0 // pred_region
    _
  $region21: #{tpu_custom_call.1} parent=0 // pred_fallthru
    _
  // Predicated region
  $region22: #{tpu_custom_call.1} parent=0 // pred_check
    _
  $region23: #{tpu_custom_call.1} parent=0 // pred_check_branch
    %23 = sbr.rel (0) target = $region25
  $region24: #{tpu_custom_call.1} parent=0 // pred_region
    _
  $region25: #{tpu_custom_call.1} parent=0 // pred_fallthru
    _
  // Predicated region
  $region26: #{tpu_custom_call.1} parent=0 // pred_check
    _
  $region27: #{tpu_custom_call.1} parent=0 // pred_check_branch
    %25 = sbr.rel (0) target = $region29
  $region28: #{tpu_custom_call.1} parent=0 // pred_region
    _
  $region29: #{tpu_custom_call.1} parent=0 // pred_fallthru
    _
  %v27 = vld [vmem:[%s0] sm:$0xff]
  %v28 = vpack.c.bf16 %v27, %v27
  %v29 = vld [vmem:[%s1] sm:$0xf]
  %v30 = vld [vmem:[%s2] sm:$0x1]
  %v32 = vlaneseq
  %v33 = vshrl.u32 %v32, 7
  %v34 = vsub.s32 0, %v33
  %v35 = vrot.slane %v30, %v34
  %vm37 = vcmask 64512
  %v39 = vsel %vm37, %v28, 0
  %vm41 = vcmask 1043456
  %v43 = vsel %vm41, %v29, 0
  %45 = vmatprep.subr.bf16.mxu0 0
  %46 = vmatpush1.bf16.msra.mxu0 0
  %47 = vmatprep.subr.bf16.mxu0 0
  %48 = vmatpush1.bf16.msra.mxu0 0
  %49 = vmatprep.subr.bf16.mxu0 0
  %50 = vmatpush1.bf16.msra.mxu0 0
  %51 = vmatprep.subr.bf16.mxu0 0
  %52 = vmatpush1.bf16.msra.mxu0 0
  %53 = vmatprep.subr.bf16.mxu0 0
  %54 = vmatpush1.bf16.msra.mxu0 0
  %55 = vmatprep.subr.bf16.mxu0 0
  %56 = vmatpush1.bf16.msra.mxu0 0
  %57 = vmatprep.subr.bf16.mxu0 0
  %58 = vmatpush1.bf16.msra.mxu0 0
  %59 = vmatprep.subr.bf16.mxu0 0
  %60 = vmatpush1.bf16.msra.mxu0 %v43
  %61 = vmatprep.subr.bf16.mxu0 0
  %62 = vmatpush2.bf16.msra.mxu0 0
  %63 = vmatprep.subr.bf16.mxu0 0
  %64 = vmatpush2.bf16.msra.mxu0 0
  %65 = vmatprep.subr.bf16.mxu0 0
  %66 = vmatpush2.bf16.msra.mxu0 0
  %67 = vmatprep.subr.bf16.mxu0 0
  %68 = vmatpush2.bf16.msra.mxu0 0
  %69 = vmatprep.subr.bf16.mxu0 0
  %70 = vmatpush2.bf16.msra.mxu0 0
  %71 = vmatprep.subr.bf16.mxu0 0
  %72 = vmatpush2.bf16.msra.mxu0 0
  %73 = vmatprep.subr.bf16.mxu0 0
  %74 = vmatpush2.bf16.msra.mxu0 0
  %75 = vmatprep.subr.bf16.mxu0 0
  %76 = vmatpush2.bf16.msra.mxu0 0
  %77 = vmatprep.mubr.bf16.mxu0 0
  %78 = vmatmul.mubr.bf16.gmra.mxu0 %v39
  %v79 = vpop.f32.mrf.mxu0
  %v80 = vadd.f32 %v35, %v79
  %v81 = vpop.f32.mrf.mxu0
  %v82 = vpop.f32.mrf.mxu0
  %v83 = vpop.f32.mrf.mxu0
  %84 = vdwg.mxu0
  %v85 = vmax.f32 %v80, 0.0
  %v86 = vpack.c.bf16 %v85, %v85
  %v87 = vld [vmem:[%s3] sm:$0xf]
  %v88 = vld [vmem:[%s3 + $0x4] sm:$0xf]
  %v89 = vld [vmem:[%s3 + $0x8] sm:$0xf]
  %v90 = vld [vmem:[%s3 + $0xc] sm:$0xf]
  %v91 = vld [vmem:[%s3 + $0x10] sm:$0xf]
  %v92 = vld [vmem:[%s3 + $0x14] sm:$0xf]
  %v93 = vld [vmem:[%s3 + $0x18] sm:$0xf]
  %v94 = vld [vmem:[%s3 + $0x1c] sm:$0xf]
  %v95 = vld [vmem:[%s3 + $0x20] sm:$0xf]
  %v96 = vld [vmem:[%s3 + $0x24] sm:$0xf]
  %v97 = vld [vmem:[%s3 + $0x28] sm:$0xf]
  %v98 = vld [vmem:[%s3 + $0x2c] sm:$0xf]
  %v99 = vld [vmem:[%s3 + $0x30] sm:$0xf]
  %v100 = vld [vmem:[%s3 + $0x34] sm:$0xf]
  %v101 = vld [vmem:[%s3 + $0x38] sm:$0xf]
  %v102 = vld [vmem:[%s3 + $0x3c] sm:$0xf]
  %v103 = vld [vmem:[%s4] sm:$0x1]
  %v105 = vlaneseq
  %v106 = vshrl.u32 %v105, 7
  %v107 = vsub.s32 0, %v106
  %v108 = vrot.slane %v103, %v107
  %v126 = vunpack.c.l.b16 %v87
  %v127 = vunpack.c.l.b16 %v88
  %v128 = vunpack.c.l.b16 %v89
  %v129 = vunpack.c.l.b16 %v90
  %v130 = vunpack.c.l.b16 %v91
  %v131 = vunpack.c.l.b16 %v92
  %v132 = vunpack.c.l.b16 %v93
  %v133 = vunpack.c.l.b16 %v94
  %v134 = vunpack.c.l.b16 %v95
  %v135 = vunpack.c.l.b16 %v96
  %v136 = vunpack.c.l.b16 %v97
  %v137 = vunpack.c.l.b16 %v98
  %v138 = vunpack.c.l.b16 %v99
  %v139 = vunpack.c.l.b16 %v100
  %v140 = vunpack.c.l.b16 %v101
  %v141 = vunpack.c.l.b16 %v102
  %v142 = vpack.c.b16 %v127, %v126
  %v143 = vpack.c.b16 %v129, %v128
  %v144 = vpack.c.b16 %v131, %v130
  %v145 = vpack.c.b16 %v133, %v132
  %v146 = vpack.c.b16 %v135, %v134
  %v147 = vpack.c.b16 %v137, %v136
  %v148 = vpack.c.b16 %v139, %v138
  %v149 = vpack.c.b16 %v141, %v140
  %158 = vmatprep.subr.bf16.mxu0 0
  %159 = vmatpush1.bf16.msra.mxu0 %v149
  %160 = vmatprep.subr.bf16.mxu0 0
  %161 = vmatpush1.bf16.msra.mxu0 %v148
  %162 = vmatprep.subr.bf16.mxu0 0
  %163 = vmatpush1.bf16.msra.mxu0 %v147
  %164 = vmatprep.subr.bf16.mxu0 0
  %165 = vmatpush1.bf16.msra.mxu0 %v146
  %166 = vmatprep.subr.bf16.mxu0 0
  %167 = vmatpush1.bf16.msra.mxu0 %v145
  %168 = vmatprep.subr.bf16.mxu0 0
  %169 = vmatpush1.bf16.msra.mxu0 %v144
  %170 = vmatprep.subr.bf16.mxu0 0
  %171 = vmatpush1.bf16.msra.mxu0 %v143
  %172 = vmatprep.subr.bf16.mxu0 0
  %173 = vmatpush1.bf16.msra.mxu0 %v142
  %174 = vmatprep.subr.bf16.mxu0 0
  %175 = vmatpush2.bf16.msra.mxu0 0
  %176 = vmatprep.subr.bf16.mxu0 0
  %177 = vmatpush2.bf16.msra.mxu0 0
  %178 = vmatprep.subr.bf16.mxu0 0
  %179 = vmatpush2.bf16.msra.mxu0 0
  %180 = vmatprep.subr.bf16.mxu0 0
  %181 = vmatpush2.bf16.msra.mxu0 0
  %182 = vmatprep.subr.bf16.mxu0 0
  %183 = vmatpush2.bf16.msra.mxu0 0
  %184 = vmatprep.subr.bf16.mxu0 0
  %185 = vmatpush2.bf16.msra.mxu0 0
  %186 = vmatprep.subr.bf16.mxu0 0
  %187 = vmatpush2.bf16.msra.mxu0 0
  %188 = vmatprep.subr.bf16.mxu0 0
  %189 = vmatpush2.bf16.msra.mxu0 0
  %190 = vmatprep.mubr.bf16.mxu0 0
  %191 = vmatmul.mubr.bf16.gmra.mxu0 %v86
  %v192 = vpop.f32.mrf.mxu0
  %v193 = vadd.f32 %v108, %v192
  %v194 = vpop.f32.mrf.mxu0
  %v195 = vpop.f32.mrf.mxu0
  %v196 = vpop.f32.mrf.mxu0
  %197 = vdwg.mxu0
  %v198 = vmax.f32 %v193, 0.0
  %v199 = vpack.c.bf16 %v198, %v198
  %v200 = vld [vmem:[%s5] sm:$0xf]
  %v201 = vld [vmem:[%s5 + $0x4] sm:$0xf]
  %v202 = vld [vmem:[%s5 + $0x8] sm:$0xf]
  %v203 = vld [vmem:[%s5 + $0xc] sm:$0xf]
  %v204 = vld [vmem:[%s5 + $0x10] sm:$0xf]
  %v205 = vld [vmem:[%s5 + $0x14] sm:$0xf]
  %v206 = vld [vmem:[%s5 + $0x18] sm:$0xf]
  %v207 = vld [vmem:[%s5 + $0x1c] sm:$0xf]
  %v216 = vunpack.c.l.b16 %v200
  %v217 = vunpack.c.l.b16 %v201
  %v218 = vunpack.c.l.b16 %v202
  %v219 = vunpack.c.l.b16 %v203
  %v220 = vunpack.c.l.b16 %v204
  %v221 = vunpack.c.l.b16 %v205
  %v222 = vunpack.c.l.b16 %v206
  %v223 = vunpack.c.l.b16 %v207
  %v224 = vpack.c.b16 %v217, %v216
  %v225 = vpack.c.b16 %v219, %v218
  %v226 = vpack.c.b16 %v221, %v220
  %v227 = vpack.c.b16 %v223, %v222
  %vm232 = vcmask 523264
  %v234 = vsel %vm232, %v199, 0
  %236 = vmatprep.subr.bf16.mxu0 0
  %237 = vmatpush1.bf16.msra.mxu0 0
  %238 = vmatprep.subr.bf16.mxu0 0
  %239 = vmatpush1.bf16.msra.mxu0 0
  %240 = vmatprep.subr.bf16.mxu0 0
  %241 = vmatpush1.bf16.msra.mxu0 0
  %242 = vmatprep.subr.bf16.mxu0 0
  %243 = vmatpush1.bf16.msra.mxu0 0
  %244 = vmatprep.subr.bf16.mxu0 0
  %245 = vmatpush1.bf16.msra.mxu0 %v227
  %246 = vmatprep.subr.bf16.mxu0 0
  %247 = vmatpush1.bf16.msra.mxu0 %v226
  %248 = vmatprep.subr.bf16.mxu0 0
  %249 = vmatpush1.bf16.msra.mxu0 %v225
  %250 = vmatprep.subr.bf16.mxu0 0
  %251 = vmatpush1.bf16.msra.mxu0 %v224
  %252 = vmatprep.subr.bf16.mxu0 0
  %253 = vmatpush2.bf16.msra.mxu0 0
  %254 = vmatprep.subr.bf16.mxu0 0
  %255 = vmatpush2.bf16.msra.mxu0 0
  %256 = vmatprep.subr.bf16.mxu0 0
  %257 = vmatpush2.bf16.msra.mxu0 0
  %258 = vmatprep.subr.bf16.mxu0 0
  %259 = vmatpush2.bf16.msra.mxu0 0
  %260 = vmatprep.subr.bf16.mxu0 0
  %261 = vmatpush2.bf16.msra.mxu0 0
  %262 = vmatprep.subr.bf16.mxu0 0
  %263 = vmatpush2.bf16.msra.mxu0 0
  %264 = vmatprep.subr.bf16.mxu0 0
  %265 = vmatpush2.bf16.msra.mxu0 0
  %266 = vmatprep.subr.bf16.mxu0 0
  %267 = vmatpush2.bf16.msra.mxu0 0
  %268 = vmatprep.mubr.bf16.mxu0 0
  %269 = vmatmul.mubr.bf16.gmra.mxu0 %v234
  %v270 = vpop.f32.mrf.mxu0
  %v271 = vadd.f32 0.0, %v270
  %v272 = vpop.f32.mrf.mxu0
  %v273 = vpop.f32.mrf.mxu0
  %v274 = vpop.f32.mrf.mxu0
  %275 = vdwg.mxu0
  %v276 = vld [vmem:[%s6] sm:$0x1]
  %v278 = vlaneseq
  %v279 = vshrl.u32 %v278, 7
  %v280 = vsub.s32 0, %v279
  %v281 = vrot.slane %v276, %v280
  %v283 = vadd.f32 %v271, %v281
  %vm284 = vcmask 15360
  %285 = vst.msk [vmem:[%s7] sm:$0xff] %vm284, %v283
  // Predicated region
  $region30: #{tpu_custom_call.1} parent=0 // pred_check
    _
  $region31: #{tpu_custom_call.1} parent=0 // pred_check_branch
    %287 = sbr.rel (0) target = $region33
  $region32: #{tpu_custom_call.1} parent=0 // pred_region
    _
  $region33: #{tpu_custom_call.1} parent=0 // pred_fallthru
    _
  // Predicated region
  $region34: #{tpu_custom_call.1} parent=0 // pred_check
    _
  $region35: #{tpu_custom_call.1} parent=0 // pred_check_branch
    %289 = sbr.rel (0) target = $region37
  $region36: #{tpu_custom_call.1} parent=0 // pred_region
    _
  $region37: #{tpu_custom_call.1} parent=0 // pred_fallthru
    _

</llo_original>
